<compile_context>
chip_gen: v6e
topology: v6e:2x2x1
jax: 0.10.0
libtpu: 0.0.40
codegen_flags: <defaults>
</compile_context>

<pallas_src>
import functools
import math

import jax
import jax.numpy as jnp
from jax import lax
from jax.experimental import pallas as pl
from jax.experimental.pallas import tpu as pltpu


def _round_up(a, b):
    return pl.cdiv(a, b) * b


# ----------------------------------------------------------------------------
# Pallas kernel: one (row-tile i, h-block j) grid step.
# ----------------------------------------------------------------------------
def _ccs_probe_kernel(x_ref, w1_ref, b1_ref, w2_ref, bias_ref, o_ref, acc_ref,
                      *, h_chunk, n_chunks):
    # x_ref   : (tile_n, d)   bf16   rows (pipelined over i)
    # w1_ref  : (d, h_blk)    bf16   fused (eraser @ W1) block
    # b1_ref  : (1, h_blk)    f32    fused bias block
    # w2_ref  : (1, h_blk)    f32    W2 row with Platt scale folded in
    # bias_ref: (1, 1)        f32    SMEM scalar: b2*scale + platt_bias
    # o_ref   : (1, tile_n)   f32    lane-dense output row for this tile
    # acc_ref : (tile_n, 128) f32    partial-sum accumulator (persists across j)
    j = pl.program_id(1)

    @pl.when(j == 0)
    def _():
        acc_ref[...] = jnp.zeros_like(acc_ref)

    x = x_ref[...]                                   # (tile_n, d) bf16

    def chunk_body(c, part):
        start = pl.multiple_of(c * h_chunk, 128)
        pre = jnp.dot(x, w1_ref[:, pl.ds(start, h_chunk)],
                      preferred_element_type=jnp.float32)
        pre = pre + b1_ref[:, pl.ds(start, h_chunk)]
        # GELU.
        # TODO(synk): PyTorch nn.GELU defaults to the exact erf form; erf lowering is not
        # guaranteed in Mosaic, so the tanh approximation is used (max abs diff ~1e-3).
        k0 = 0.7978845608028654  # sqrt(2/pi)
        g = 0.5 * pre * (1.0 + jnp.tanh(k0 * (pre + 0.044715 * pre * pre * pre)))
        gw = g * w2_ref[:, pl.ds(start, h_chunk)]
        # Fold this chunk's lanes down to 128 with aligned static slices (pure VPU adds);
        # live f32 intermediates stay bounded to O(tile_n * h_chunk).
        for k in range(h_chunk // 128):
            part = part + gw[:, k * 128:(k + 1) * 128]
        return part

    part = lax.fori_loop(0, n_chunks, chunk_body,
                         jnp.zeros(acc_ref.shape, jnp.float32), unroll=True)
    acc_ref[...] += part

    @pl.when(j == pl.num_programs(1) - 1)
    def _():
        # Collapse the remaining 128 lanes and emit a lane-dense (1, tile_n) row.
        # ones(1,128) . acc(tile_n,128)^T on the MXU (~128 cycles/tile) avoids a
        # degenerate (tile_n,1)->(1,tile_n) relayout.
        row = lax.dot_general(
            jnp.ones((1, 128), jnp.float32), acc_ref[...],
            dimension_numbers=(((1,), (1,)), ((), ())),
            preferred_element_type=jnp.float32)       # (1, tile_n)
        o_ref[...] = row + bias_ref[0, 0]


# ----------------------------------------------------------------------------
# Wrapper: algebraic folding, padding, generation-aware tiling, pallas_call.
# ----------------------------------------------------------------------------
def ccs_reporter_forward(x, params, tile_n=None, h_chunk_target=512):
    n, v, d = x.shape
    mu, wer, w1, b1, w2, b2, scale, pbias = params
    h = w1.shape[1]
    N = n * v

    # ---- fold eraser into Linear1 and Platt scaling into Linear2 (f32, exact up to
    #      FP reordering) -------------------------------------------------------------
    w1_fused = wer @ w1                                   # (d, h)
    b1_fused = (mu - mu @ wer) @ w1 + b1                  # (1, h)
    w2_row = (w2[:, 0] * scale[0, 0])[None, :]            # (1, h)
    bias_total = (b2[0, 0] * scale[0, 0] + pbias[0, 0]).reshape(1, 1)

    # ---- row tiling ------------------------------------------------------------------
    if tile_n is None:
        tile_n = 512 if d <= 2048 else 256
    tile_n = max(128, min(_round_up(tile_n, 128), _round_up(N, 128)))
    n_tiles = pl.cdiv(N, tile_n)
    N_pad = n_tiles * tile_n

    # ---- h chunking (in-kernel loop granularity) --------------------------------------
    h_pad = _round_up(h, 128)
    h_chunk = _round_up(pl.cdiv(h_pad, pl.cdiv(h_pad, h_chunk_target)), 128)
    h_pad = _round_up(h_pad, h_chunk)

    # ---- generation-aware VMEM budget --------------------------------------------------
    try:
        cap = int(pltpu.get_tpu_info().vmem_capacity_bytes)
    except Exception:
        cap = 64 * 1024 * 1024                            # conservative (v7x per-TC) fallback
    vmem_budget = int(cap * 0.8)

    # ---- decide whether fused W1 stays VMEM-resident or streams over an h grid axis ----
    bytes_fixed = (2 * tile_n * d * 2                      # x tile, double-buffered, bf16
                   + 2 * tile_n * 4                        # (1, tile_n) f32 out, double-buffered
                   + tile_n * 128 * 4                      # accumulator scratch
                   + 4 * tile_n * h_chunk * 4              # live chunk intermediates headroom
                   + (2 << 20))                            # misc / compiler-internal scratch
    per_hcol = d * 2 + 2 * 4                               # one h column: W1(bf16) + b1,w2(f32)
    if bytes_fixed + h_pad * per_hcol <= vmem_budget:
        h_blk, w_bufs = h_pad, 1                           # whole fused W1 resident, single buffer
    else:
        h_blk = (vmem_budget - bytes_fixed) // (2 * per_hcol)   # double-buffered streaming blocks
        h_blk = min(h_pad, max(h_chunk, (h_blk // h_chunk) * h_chunk))
        h_pad = _round_up(h_pad, h_blk)
        w_bufs = 2
    n_hblk = h_pad // h_blk

    # ---- pad (zero cols/rows -> exact) and cast ----------------------------------------
    if h_pad != h:
        w1_fused = jnp.pad(w1_fused, ((0, 0), (0, h_pad - h)))
        b1_fused = jnp.pad(b1_fused, ((0, 0), (0, h_pad - h)))
        w2_row = jnp.pad(w2_row, ((0, 0), (0, h_pad - h)))
    x2 = x.reshape(N, d)
    if N_pad != N:
        x2 = jnp.pad(x2, ((0, N_pad - N), (0, 0)))         # zero rows; sliced off at the end

    x2 = x2.astype(jnp.bfloat16)
    w1_fused = w1_fused.astype(jnp.bfloat16)
    b1_fused = b1_fused.astype(jnp.float32)
    w2_row = w2_row.astype(jnp.float32)
    bias_total = bias_total.astype(jnp.float32)

    est = bytes_fixed + w_bufs * h_blk * per_hcol
    vmem_limit = int(min(vmem_budget, max(2 * est, 32 * 1024 * 1024)))

    w1_passes = 1 if n_hblk == 1 else n_tiles
    cost = pl.CostEstimate(
        flops=2 * N_pad * d * h_pad + 2 * N_pad * h_pad + 2 * N_pad * 128,
        transcendentals=N_pad * h_pad,
        bytes_accessed=int(N_pad * d * 2 + w1_passes * d * h_pad * 2
                           + 2 * h_pad * 4 + N_pad * 4),
    )

    # Constant-index weights get a single buffer; streamed weights use the default (2).
    def wspec(shape):
        if n_hblk == 1:
            return pl.BlockSpec(shape, lambda i, j: (0, j), pipeline_mode=pl.Buffered(1))
        return pl.BlockSpec(shape, lambda i, j: (0, j))

    kernel = functools.partial(_ccs_probe_kernel,
                               h_chunk=h_chunk, n_chunks=h_blk // h_chunk)

    out = pl.pallas_call(
        kernel,
        out_shape=jax.ShapeDtypeStruct((n_tiles, tile_n), jnp.float32),
        grid=(n_tiles, n_hblk),
        in_specs=[
            pl.BlockSpec((tile_n, d), lambda i, j: (i, 0)),       # x rows (pipelined over i)
            wspec((d, h_blk)),                                    # fused W1
            wspec((1, h_blk)),                                    # fused b1
            wspec((1, h_blk)),                                    # w2 * scale
            pl.BlockSpec(memory_space=pltpu.MemorySpace.SMEM),    # b2*scale + bias scalar
        ],
        out_specs=pl.BlockSpec((1, tile_n), lambda i, j: (i, 0)), # lane-dense output row
        scratch_shapes=[pltpu.VMEM((tile_n, 128), jnp.float32)],
        compiler_params=pltpu.CompilerParams(
            dimension_semantics=("parallel", "arbitrary"),
            vmem_limit_bytes=vmem_limit,
        ),
        cost_estimate=cost,
    )(x2, w1_fused, b1_fused, w2_row, bias_total)

    # raw_scores.squeeze(-1) -> (n, v); the second .squeeze(-1) only drops v if v == 1.
    res = out.reshape(N_pad)[:N].reshape(n, v)
    if v == 1:
        res = res.reshape(n)
    return res


# ----------------------------------------------------------------------------
# Deterministic parameter construction (mirrors CcsReporter.__init__ shapes with
# cfg = CcsConfig(num_layers=2, activation='gelu', bias=True, norm='leace')).
# ----------------------------------------------------------------------------
def make_params(key, in_features, num_variants):
    d = in_features
    h = 4 * d // 3                               # cfg.hidden_size default expansion
    z_dim = 2 * num_variants                     # erase_prompts=True
    k_mu, k_q, k_w1, k_b1, k_w2, k_b2 = jax.random.split(key, 6)

    # LEACE-style eraser: orthogonal projection removing a z_dim-dim subspace.
    mu = jax.random.normal(k_mu, (1, d), jnp.float32)
    q, _ = jnp.linalg.qr(jax.random.normal(k_q, (d, z_dim), jnp.float32))
    wer = jnp.eye(d, dtype=jnp.float32) - q @ q.T      # (d, d)

    # nn.Linear default (Kaiming-uniform) init: U(-1/sqrt(fan_in), 1/sqrt(fan_in)).
    def linear_init(kw, kb, fan_in, fan_out):
        bound = 1.0 / math.sqrt(fan_in)
        w = jax.random.uniform(kw, (fan_in, fan_out), jnp.float32, -bound, bound)
        b = jax.random.uniform(kb, (1, fan_out), jnp.float32, -bound, bound)
        return w, b

    w1, b1 = linear_init(k_w1, k_b1, d, h)       # Linear(d, h), stored as (d, h)
    w2, b2 = linear_init(k_w2, k_b2, h, 1)       # Linear(h, 1), stored as (h, 1)

    scale = jnp.ones((1, 1), jnp.float32)        # self.scale = ones(1)
    pbias = jnp.zeros((1, 1), jnp.float32)       # self.bias  = zeros(1)
    return (mu, wer, w1, b1, w2, b2, scale, pbias)


# Pure-JAX f32 reference (unfused math, no Pallas) for a correctness check.
def reference_forward(x, params):
    n, v, d = x.shape
    mu, wer, w1, b1, w2, b2, scale, pbias = params
    x2 = x.reshape(n * v, d)
    xn = (x2 - mu) @ wer + mu
    hpre = xn @ w1 + b1
    c = 0.7978845608028654
    g = 0.5 * hpre * (1.0 + jnp.tanh(c * (hpre + 0.044715 * hpre ** 3)))
    raw = g @ w2 + b2
    out = raw * scale[0, 0] + pbias[0, 0]
    res = out.reshape(n, v)
    if v == 1:
        res = res.reshape(n)
    return res


if __name__ == "__main__":
    key = jax.random.PRNGKey(0)
    n, num_variants, in_features = 8, 2, 32      # x: (n, v, d)

    k_x, k_p = jax.random.split(key)
    x = jax.random.normal(k_x, (n, num_variants, in_features), jnp.float32)
    params = make_params(k_p, in_features, num_variants)

    out = jax.block_until_ready(ccs_reporter_forward(x, params))
    ref = reference_forward(x, params)

    assert out.shape == (n, num_variants), out.shape
    # bf16 matmul + algebraic refactoring -> loosened tolerance vs. the f32 reference.
    assert jnp.allclose(out, ref, atol=5e-2, rtol=5e-2), (out, ref)

    print("KERNEL_OK")
</pallas_src>

<mosaic_0001>
module attributes {stable_mosaic.version = 11 : i64} {
  func.func @_ccs_probe_kernel(%arg0: i32, %arg1: i32, %arg2: memref<128x32xbf16, #tpu.memory_space<vmem>>, %arg3: memref<32x128xbf16, #tpu.memory_space<vmem>>, %arg4: memref<1x128xf32, #tpu.memory_space<vmem>>, %arg5: memref<1x128xf32, #tpu.memory_space<vmem>>, %arg6: memref<1x1xf32, #tpu.memory_space<smem>>, %arg7: memref<1x128xf32, #tpu.memory_space<vmem>>, %arg8: memref<128x128xf32, #tpu.memory_space<vmem>>) attributes {dimension_semantics = [#tpu.dimension_semantics<parallel>, #tpu.dimension_semantics<arbitrary>], iteration_bounds = array<i64: 1, 1>, scalar_prefetch = 0 : i64, scratch_operands = 1 : i64, tpu.core_type = #tpu.core_type<tc>, window_params = [{transform_indices = @transform_0, window_bounds = array<i64: 128, 32>}, {pipeline_mode = #tpu.pipeline_mode<synchronous>, transform_indices = @transform_1, window_bounds = array<i64: 32, 128>}, {pipeline_mode = #tpu.pipeline_mode<synchronous>, transform_indices = @transform_2, window_bounds = array<i64: 1, 128>}, {pipeline_mode = #tpu.pipeline_mode<synchronous>, transform_indices = @transform_3, window_bounds = array<i64: 1, 128>}, {transform_indices = @transform_4, window_bounds = array<i64: 1, 1>}, {transform_indices = @transform_5, window_bounds = array<i64: 1, 128>}]} {
    %c0_i32 = arith.constant 0 : i32
    %0 = arith.cmpi eq, %arg1, %c0_i32 : i32
    %1 = arith.extui %0 : i1 to i32
    %c0_i32_0 = arith.constant 0 : i32
    %2 = arith.cmpi ne, %1, %c0_i32_0 : i32
    scf.if %2 {
      %cst_17 = arith.constant 0.000000e+00 : f32
      %38 = vector.broadcast %cst_17 : f32 to vector<128x128xf32>
      %c0_18 = arith.constant 0 : index
      %c0_19 = arith.constant 0 : index
      %39 = vector.load %arg8[%c0_18, %c0_19] : memref<128x128xf32, #tpu.memory_space<vmem>>, vector<128x128xf32>
      tpu.vector_store %arg8[%c0_18, %c0_19], %38 {strides = array<i32>} : memref<128x128xf32, #tpu.memory_space<vmem>>, vector<128x128xf32>,
    } else {
    }
    %c0 = arith.constant 0 : index
    %c0_1 = arith.constant 0 : index
    %3 = vector.load %arg2[%c0, %c0_1] : memref<128x32xbf16, #tpu.memory_space<vmem>>, vector<128x32xbf16>
    %cst = arith.constant 0.000000e+00 : f32
    %4 = vector.broadcast %cst : f32 to vector<128x128xf32>
    %c0_i32_2 = arith.constant 0 : i32
    %c128_i32 = arith.constant 128 : i32
    %5 = arith.muli %c0_i32_2, %c128_i32 : i32
    %6 = tpu.assume_multiple %5, 128 : i32
    %c0_3 = arith.constant 0 : index
    %7 = arith.index_cast %6 : i32 to index
    %8 = vector.load %arg3[%c0_3, %7] : memref<32x128xbf16, #tpu.memory_space<vmem>>, vector<32x128xbf16>
    %cst_4 = arith.constant dense<0.000000e+00> : vector<128x128xf32>
    %9 = tpu.matmul %3, %8, %cst_4 {dimension_numbers = #tpu.dot_dimension_numbers<[1], [0], [0], [1], [0, 0, 1, 1], [], []>} : vector<128x32xbf16>, vector<32x128xbf16>, vector<128x128xf32> -> vector<128x128xf32>
    %c0_5 = arith.constant 0 : index
    %10 = arith.index_cast %6 : i32 to index
    %11 = vector.load %arg4[%c0_5, %10] : memref<1x128xf32, #tpu.memory_space<vmem>>, vector<1x128xf32>
    %12 = vector.broadcast %11 : vector<1x128xf32> to vector<128x128xf32>
    %13 = arith.addf %9, %12 : vector<128x128xf32>
    %cst_6 = arith.constant 5.000000e-01 : f32
    %14 = vector.broadcast %cst_6 : f32 to vector<128x128xf32>
    %15 = arith.mulf %14, %13 : vector<128x128xf32>
    %cst_7 = arith.constant 4.471500e-02 : f32
    %16 = vector.broadcast %cst_7 : f32 to vector<128x128xf32>
    %17 = arith.mulf %16, %13 : vector<128x128xf32>
    %18 = arith.mulf %17, %13 : vector<128x128xf32>
    %19 = arith.mulf %18, %13 : vector<128x128xf32>
    %20 = arith.addf %13, %19 : vector<128x128xf32>
    %cst_8 = arith.constant 0.797884583 : f32
    %21 = vector.broadcast %cst_8 : f32 to vector<128x128xf32>
    %22 = arith.mulf %21, %20 : vector<128x128xf32>
    %23 = math.tanh %22 : vector<128x128xf32>
    %cst_9 = arith.constant 1.000000e+00 : f32
    %24 = vector.broadcast %cst_9 : f32 to vector<128x128xf32>
    %25 = arith.addf %24, %23 : vector<128x128xf32>
    %26 = arith.mulf %15, %25 : vector<128x128xf32>
    %c0_10 = arith.constant 0 : index
    %27 = arith.index_cast %6 : i32 to index
    %28 = vector.load %arg5[%c0_10, %27] : memref<1x128xf32, #tpu.memory_space<vmem>>, vector<1x128xf32>
    %29 = vector.broadcast %28 : vector<1x128xf32> to vector<128x128xf32>
    %30 = arith.mulf %26, %29 : vector<128x128xf32>
    %31 = arith.addf %4, %30 : vector<128x128xf32>
    %c1_i32 = arith.constant 1 : i32
    %c0_11 = arith.constant 0 : index
    %c0_12 = arith.constant 0 : index
    %32 = vector.load %arg8[%c0_11, %c0_12] : memref<128x128xf32, #tpu.memory_space<vmem>>, vector<128x128xf32>
    %33 = arith.addf %32, %31 : vector<128x128xf32>
    %c0_13 = arith.constant 0 : index
    %c0_14 = arith.constant 0 : index
    %34 = vector.load %arg8[%c0_13, %c0_14] : memref<128x128xf32, #tpu.memory_space<vmem>>, vector<128x128xf32>
    tpu.vector_store %arg8[%c0_13, %c0_14], %33 {strides = array<i32>} : memref<128x128xf32, #tpu.memory_space<vmem>>, vector<128x128xf32>,
    %c0_i32_15 = arith.constant 0 : i32
    %35 = arith.cmpi eq, %arg1, %c0_i32_15 : i32
    %36 = arith.extui %35 : i1 to i32
    %c0_i32_16 = arith.constant 0 : i32
    %37 = arith.cmpi ne, %36, %c0_i32_16 : i32
    scf.if %37 {
      %cst_17 = arith.constant 1.000000e+00 : f32
      %38 = vector.broadcast %cst_17 : f32 to vector<1x128xf32>
      %c0_18 = arith.constant 0 : index
      %c0_19 = arith.constant 0 : index
      %39 = vector.load %arg8[%c0_18, %c0_19] : memref<128x128xf32, #tpu.memory_space<vmem>>, vector<128x128xf32>
      %cst_20 = arith.constant dense<0.000000e+00> : vector<1x128xf32>
      %40 = tpu.matmul %38, %39, %cst_20 {dimension_numbers = #tpu.dot_dimension_numbers<[1], [1], [0], [0], [0, 0, 1, 0], [], []>} : vector<1x128xf32>, vector<128x128xf32>, vector<1x128xf32> -> vector<1x128xf32>
      %c0_21 = arith.constant 0 : index
      %c0_22 = arith.constant 0 : index
      %41 = memref.load %arg6[%c0_21, %c0_22] : memref<1x1xf32, #tpu.memory_space<smem>>
      %42 = vector.broadcast %41 : f32 to vector<1x128xf32>
      %43 = arith.addf %40, %42 : vector<1x128xf32>
      %c0_23 = arith.constant 0 : index
      %c0_24 = arith.constant 0 : index
      %44 = vector.load %arg7[%c0_23, %c0_24] : memref<1x128xf32, #tpu.memory_space<vmem>>, vector<1x128xf32>
      tpu.vector_store %arg7[%c0_23, %c0_24], %43 {strides = array<i32>} : memref<1x128xf32, #tpu.memory_space<vmem>>, vector<1x128xf32>,
    } else {
    }
    return
  }
  func.func @transform_0(%arg0: i32, %arg1: i32) -> (i32, i32) {
    %c0_i32 = arith.constant 0 : i32
    %c0_i32_0 = arith.constant 0 : i32
    return %arg0, %c0_i32 : i32, i32
  }
  func.func @transform_1(%arg0: i32, %arg1: i32) -> (i32, i32) {
    %c0_i32 = arith.constant 0 : i32
    %c0_i32_0 = arith.constant 0 : i32
    return %c0_i32, %arg1 : i32, i32
  }
  func.func @transform_2(%arg0: i32, %arg1: i32) -> (i32, i32) {
    %c0_i32 = arith.constant 0 : i32
    %c0_i32_0 = arith.constant 0 : i32
    return %c0_i32, %arg1 : i32, i32
  }
  func.func @transform_3(%arg0: i32, %arg1: i32) -> (i32, i32) {
    %c0_i32 = arith.constant 0 : i32
    %c0_i32_0 = arith.constant 0 : i32
    return %c0_i32, %arg1 : i32, i32
  }
  func.func @transform_4(%arg0: i32, %arg1: i32) -> (i32, i32) {
    %c0_i32 = arith.constant 0 : i32
    %c0_i32_0 = arith.constant 0 : i32
    %c0_i32_1 = arith.constant 0 : i32
    return %c0_i32, %c0_i32_0 : i32, i32
  }
  func.func @transform_5(%arg0: i32, %arg1: i32) -> (i32, i32) {
    %c0_i32 = arith.constant 0 : i32
    %c0_i32_0 = arith.constant 0 : i32
    return %arg0, %c0_i32 : i32, i32
  }
}

</mosaic_0001>

<llo_original>
// kernel: tpu_custom_call.1
$region0: #{tpu_custom_call.1}
  #allocation0 [shape = 'u32[]', space=smem, size = 0x4, offset = 0x4, fixed_abs, tag = 'smem constant byte address 0x4 - core index']
  #allocation1 [shape = 'u32[144,128]{1,0:T(1,128)}', space=vmem, size = 0x12000, scoped, tag = 'internal scratch']
  #allocation2 [shape = 'f32[128,128]{1,0:T(8,128)}', space=vmem, size = 0x10000, scoped, tag = 'scratch operand']
  #allocation3 [shape = 'f32[1,1]{1,0:T(1,128)S(6)}', space=smem, size = 0x200, scoped, tag = 'scoped memory for tpu_custom_call.1']
  %s0 = inlined_call_operand.vmem [shape: bf16[128,32], index: 0, kind: input, shape index: {}]
  %s1 = inlined_call_operand.vmem [shape: bf16[32,128], index: 1, kind: input, shape index: {}]
  %s2 = inlined_call_operand.vmem [shape: f32[1,128], index: 2, kind: input, shape index: {}]
  %s3 = inlined_call_operand.vmem [shape: f32[1,128], index: 3, kind: input, shape index: {}]
  %s4 = inlined_call_operand.<no memory space> [shape: f32[1,1], index: 4, kind: input, shape index: {}]
  %s5 = inlined_call_operand.hbm [shape: f32[1,128], index: 5, kind: output, shape index: {}]
  %s6 = sld [smem:[#allocation0]]
  $region38: #{tpu_custom_call.1} parent=0
    _
  %s8 = ssub.s32 1, %s6
  %s9 = scalar_select 0, %s8, %s6
  %10 = sst [smem:[#allocation3]] %s4
  $region1: #{tpu_custom_call.1} parent=0
    #allocation4 [shape = 'u8[512]{0}', space=vmem, size = 0x400, scoped, tag = 'output window, operand 0, single buffered']
    #allocation5 [shape = 's32[1]{0}', space=sflag, size = 0x4, scoped, tag = 'scoped memory for tpu_custom_call.1']
    %11 = vsyncpa [#allocation5], 0
    // Predicated region
    $region2: #{tpu_custom_call.1} parent=1 // pred_check
      _
    $region3: #{tpu_custom_call.1} parent=1 // pred_check_branch
      %13 = sbr.rel (0) target = $region5
    $region4: #{tpu_custom_call.1} parent=1 // pred_region
      _
    $region5: #{tpu_custom_call.1} parent=1 // pred_fallthru
      _
    // Predicated region
    $region6: #{tpu_custom_call.1} parent=1 // pred_check
      _
    $region7: #{tpu_custom_call.1} parent=1 // pred_check_branch
      %15 = sbr.rel (0) target = $region9
    $region8: #{tpu_custom_call.1} parent=1 // pred_region
      _
    $region9: #{tpu_custom_call.1} parent=1 // pred_fallthru
      _
    // Predicated region
    $region10: #{tpu_custom_call.1} parent=1 // pred_check
      _
    $region11: #{tpu_custom_call.1} parent=1 // pred_check_branch
      %17 = sbr.rel (0) target = $region13
    $region12: #{tpu_custom_call.1} parent=1 // pred_region
      _
    $region13: #{tpu_custom_call.1} parent=1 // pred_fallthru
      _
    // Predicated region
    $region14: #{tpu_custom_call.1} parent=1 // pred_check
      _
    $region15: #{tpu_custom_call.1} parent=1 // pred_check_branch
      %19 = sbr.rel (0) target = $region17
    $region16: #{tpu_custom_call.1} parent=1 // pred_region
      _
    $region17: #{tpu_custom_call.1} parent=1 // pred_fallthru
      _
    // Predicated region
    $region18: #{tpu_custom_call.1} parent=1 // pred_check
      _
    $region19: #{tpu_custom_call.1} parent=1 // pred_check_branch
      %21 = sbr.rel (0) target = $region21
    $region20: #{tpu_custom_call.1} parent=1 // pred_region
      _
    $region21: #{tpu_custom_call.1} parent=1 // pred_fallthru
      _
    %p23 = scmp.eq.s32.totalorder 0, 0
    // Predicated region
    $region22: #{tpu_custom_call.1} parent=1 // pred_check
      %p24 = pneg %p23
    $region23: #{tpu_custom_call.1} parent=1 // pred_check_branch
      %26 = sbr.rel (%p24) target = $region25
    $region24: #{tpu_custom_call.1} parent=1 // pred_region
      %27 = vst [vmem:[#allocation2] sm:$0xff] 0.0
      %28 = vst [vmem:[#allocation2 + $0x8] sm:$0xff] 0.0
      %29 = vst [vmem:[#allocation2 + $0x10] sm:$0xff] 0.0
      %30 = vst [vmem:[#allocation2 + $0x18] sm:$0xff] 0.0
      %31 = vst [vmem:[#allocation2 + $0x20] sm:$0xff] 0.0
      %32 = vst [vmem:[#allocation2 + $0x28] sm:$0xff] 0.0
      %33 = vst [vmem:[#allocation2 + $0x30] sm:$0xff] 0.0
      %34 = vst [vmem:[#allocation2 + $0x38] sm:$0xff] 0.0
      %35 = vst [vmem:[#allocation2 + $0x40] sm:$0xff] 0.0
      %36 = vst [vmem:[#allocation2 + $0x48] sm:$0xff] 0.0
      %37 = vst [vmem:[#allocation2 + $0x50] sm:$0xff] 0.0
      %38 = vst [vmem:[#allocation2 + $0x58] sm:$0xff] 0.0
      %39 = vst [vmem:[#allocation2 + $0x60] sm:$0xff] 0.0
      %40 = vst [vmem:[#allocation2 + $0x68] sm:$0xff] 0.0
      %41 = vst [vmem:[#allocation2 + $0x70] sm:$0xff] 0.0
      %42 = vst [vmem:[#allocation2 + $0x78] sm:$0xff] 0.0
    $region25: #{tpu_custom_call.1} parent=1 // pred_fallthru
      _
    %v43 = vld [vmem:[%s0] sm:$0xf]
    %v44 = vld [vmem:[%s0 + $0x4] sm:$0xf]
    %v45 = vld [vmem:[%s0 + $0x8] sm:$0xf]
    %v46 = vld [vmem:[%s0 + $0xc] sm:$0xf]
    %v47 = vld [vmem:[%s0 + $0x10] sm:$0xf]
    %v48 = vld [vmem:[%s0 + $0x14] sm:$0xf]
    %v49 = vld [vmem:[%s0 + $0x18] sm:$0xf]
    %v50 = vld [vmem:[%s0 + $0x1c] sm:$0xf]
    %v51 = vld [vmem:[%s0 + $0x20] sm:$0xf]
    %v52 = vld [vmem:[%s0 + $0x24] sm:$0xf]
    %v53 = vld [vmem:[%s0 + $0x28] sm:$0xf]
    %v54 = vld [vmem:[%s0 + $0x2c] sm:$0xf]
    %v55 = vld [vmem:[%s0 + $0x30] sm:$0xf]
    %v56 = vld [vmem:[%s0 + $0x34] sm:$0xf]
    %v57 = vld [vmem:[%s0 + $0x38] sm:$0xf]
    %v58 = vld [vmem:[%s0 + $0x3c] sm:$0xf]
    %v59 = vld [vmem:[%s1] sm:$0xf]
    %v60 = vld [vmem:[%s1 + $0x4] sm:$0xf]
    %v61 = vld [vmem:[%s1 + $0x8] sm:$0xf]
    %v62 = vld [vmem:[%s1 + $0xc] sm:$0xf]
    %v63 = vld [vmem:[%s2] sm:$0x1]
    %v65 = vlaneseq
    %v66 = vshrl.u32 %v65, 7
    %v67 = vsub.s32 0, %v66
    %v68 = vrot.slane %v63, %v67
    %v86 = vunpack.c.l.b16 %v43
    %v87 = vunpack.c.l.b16 %v44
    %v88 = vunpack.c.l.b16 %v45
    %v89 = vunpack.c.l.b16 %v46
    %v90 = vunpack.c.l.b16 %v47
    %v91 = vunpack.c.l.b16 %v48
    %v92 = vunpack.c.l.b16 %v49
    %v93 = vunpack.c.l.b16 %v50
    %v94 = vunpack.c.l.b16 %v51
    %v95 = vunpack.c.l.b16 %v52
    %v96 = vunpack.c.l.b16 %v53
    %v97 = vunpack.c.l.b16 %v54
    %v98 = vunpack.c.l.b16 %v55
    %v99 = vunpack.c.l.b16 %v56
    %v100 = vunpack.c.l.b16 %v57
    %v101 = vunpack.c.l.b16 %v58
    %v102 = vpack.c.b16 %v87, %v86
    %v103 = vpack.c.b16 %v89, %v88
    %v104 = vpack.c.b16 %v91, %v90
    %v105 = vpack.c.b16 %v93, %v92
    %v106 = vpack.c.b16 %v95, %v94
    %v107 = vpack.c.b16 %v97, %v96
    %v108 = vpack.c.b16 %v99, %v98
    %v109 = vpack.c.b16 %v101, %v100
    %v114 = vunpack.c.l.b16 %v59
    %v115 = vunpack.c.l.b16 %v60
    %v116 = vunpack.c.l.b16 %v61
    %v117 = vunpack.c.l.b16 %v62
    %v118 = vpack.c.b16 %v115, %v114
    %v119 = vpack.c.b16 %v117, %v116
    %vm122 = vcmask 261120
    %v124 = vsel %vm122, %v102, 0
    %v127 = vsel %vm122, %v103, 0
    %v130 = vsel %vm122, %v104, 0
    %v133 = vsel %vm122, %v105, 0
    %v136 = vsel %vm122, %v106, 0
    %v139 = vsel %vm122, %v107, 0
    %v142 = vsel %vm122, %v108, 0
    %v145 = vsel %vm122, %v109, 0
    %147 = vmatprep.subr.bf16.mxu0 0
    %148 = vmatpush1.bf16.msra.mxu0 0
    %149 = vmatprep.subr.bf16.mxu0 0
    %150 = vmatpush1.bf16.msra.mxu0 0
    %151 = vmatprep.subr.bf16.mxu0 0
    %152 = vmatpush1.bf16.msra.mxu0 0
    %153 = vmatprep.subr.bf16.mxu0 0
    %154 = vmatpush1.bf16.msra.mxu0 0
    %155 = vmatprep.subr.bf16.mxu0 0
    %156 = vmatpush1.bf16.msra.mxu0 0
    %157 = vmatprep.subr.bf16.mxu0 0
    %158 = vmatpush1.bf16.msra.mxu0 0
    %159 = vmatprep.subr.bf16.mxu0 0
    %160 = vmatpush1.bf16.msra.mxu0 %v119
    %161 = vmatprep.subr.bf16.mxu0 0
    %162 = vmatpush1.bf16.msra.mxu0 %v118
    %163 = vmatprep.subr.bf16.mxu0 0
    %164 = vmatpush2.bf16.msra.mxu0 0
    %165 = vmatprep.subr.bf16.mxu0 0
    %166 = vmatpush2.bf16.msra.mxu0 0
    %167 = vmatprep.subr.bf16.mxu0 0
    %168 = vmatpush2.bf16.msra.mxu0 0
    %169 = vmatprep.subr.bf16.mxu0 0
    %170 = vmatpush2.bf16.msra.mxu0 0
    %171 = vmatprep.subr.bf16.mxu0 0
    %172 = vmatpush2.bf16.msra.mxu0 0
    %173 = vmatprep.subr.bf16.mxu0 0
    %174 = vmatpush2.bf16.msra.mxu0 0
    %175 = vmatprep.subr.bf16.mxu0 0
    %176 = vmatpush2.bf16.msra.mxu0 0
    %177 = vmatprep.subr.bf16.mxu0 0
    %178 = vmatpush2.bf16.msra.mxu0 0
    %179 = vmatprep.mubr.bf16.mxu0 0
    %180 = vmatmul.mubr.bf16.gmra.mxu0 %v124
    %v181 = vpop.f32.mrf.mxu0
    %v182 = vadd.f32 %v68, %v181
    %v183 = vpop.f32.mrf.mxu0
    %v184 = vpop.f32.mrf.mxu0
    %v185 = vadd.f32 %v68, %v184
    %v186 = vpop.f32.mrf.mxu0
    %187 = vmatprep.mubr.bf16.mxu0 0
    %188 = vmatmul.mubr.bf16.gmra.mxu0 %v127
    %v189 = vpop.f32.mrf.mxu0
    %v190 = vadd.f32 %v68, %v189
    %v191 = vpop.f32.mrf.mxu0
    %v192 = vpop.f32.mrf.mxu0
    %v193 = vadd.f32 %v68, %v192
    %v194 = vpop.f32.mrf.mxu0
    %195 = vmatprep.mubr.bf16.mxu0 0
    %196 = vmatmul.mubr.bf16.gmra.mxu0 %v130
    %v197 = vpop.f32.mrf.mxu0
    %v198 = vadd.f32 %v68, %v197
    %v199 = vpop.f32.mrf.mxu0
    %v200 = vpop.f32.mrf.mxu0
    %v201 = vadd.f32 %v68, %v200
    %v202 = vpop.f32.mrf.mxu0
    %203 = vmatprep.mubr.bf16.mxu0 0
    %204 = vmatmul.mubr.bf16.gmra.mxu0 %v133
    %v205 = vpop.f32.mrf.mxu0
    %v206 = vadd.f32 %v68, %v205
    %v207 = vpop.f32.mrf.mxu0
    %v208 = vpop.f32.mrf.mxu0
    %v209 = vadd.f32 %v68, %v208
    %v210 = vpop.f32.mrf.mxu0
    %211 = vmatprep.mubr.bf16.mxu0 0
    %212 = vmatmul.mubr.bf16.gmra.mxu0 %v136
    %v213 = vpop.f32.mrf.mxu0
    %v214 = vadd.f32 %v68, %v213
    %v215 = vpop.f32.mrf.mxu0
    %v216 = vpop.f32.mrf.mxu0
    %v217 = vadd.f32 %v68, %v216
    %v218 = vpop.f32.mrf.mxu0
    %219 = vmatprep.mubr.bf16.mxu0 0
    %220 = vmatmul.mubr.bf16.gmra.mxu0 %v139
    %v221 = vpop.f32.mrf.mxu0
    %v222 = vadd.f32 %v68, %v221
    %v223 = vpop.f32.mrf.mxu0
    %v224 = vpop.f32.mrf.mxu0
    %v225 = vadd.f32 %v68, %v224
    %v226 = vpop.f32.mrf.mxu0
    %227 = vmatprep.mubr.bf16.mxu0 0
    %228 = vmatmul.mubr.bf16.gmra.mxu0 %v142
    %v229 = vpop.f32.mrf.mxu0
    %v230 = vadd.f32 %v68, %v229
    %v231 = vpop.f32.mrf.mxu0
    %v232 = vpop.f32.mrf.mxu0
    %v233 = vadd.f32 %v68, %v232
    %v234 = vpop.f32.mrf.mxu0
    %235 = vmatprep.mubr.bf16.mxu0 0
    %236 = vmatmul.mubr.bf16.gmra.mxu0 %v145
    %v237 = vpop.f32.mrf.mxu0
    %v238 = vadd.f32 %v68, %v237
    %v239 = vpop.f32.mrf.mxu0
    %v240 = vpop.f32.mrf.mxu0
    %v241 = vadd.f32 %v68, %v240
    %v242 = vpop.f32.mrf.mxu0
    %243 = vdwg.mxu0
    %v244 = vmul.f32 %v182, 0.5
    %v245 = vmul.f32 %v185, 0.5
    %v246 = vmul.f32 %v190, 0.5
    %v247 = vmul.f32 %v193, 0.5
    %v248 = vmul.f32 %v198, 0.5
    %v249 = vmul.f32 %v201, 0.5
    %v250 = vmul.f32 %v206, 0.5
    %v251 = vmul.f32 %v209, 0.5
    %v252 = vmul.f32 %v214, 0.5
    %v253 = vmul.f32 %v217, 0.5
    %v254 = vmul.f32 %v222, 0.5
    %v255 = vmul.f32 %v225, 0.5
    %v256 = vmul.f32 %v230, 0.5
    %v257 = vmul.f32 %v233, 0.5
    %v258 = vmul.f32 %v238, 0.5
    %v259 = vmul.f32 %v241, 0.5
    %v260 = vmul.f32 %v182, 0.044715
    %v261 = vmul.f32 %v185, 0.044715
    %v262 = vmul.f32 %v190, 0.044715
    %v263 = vmul.f32 %v193, 0.044715
    %v264 = vmul.f32 %v198, 0.044715
    %v265 = vmul.f32 %v201, 0.044715
    %v266 = vmul.f32 %v206, 0.044715
    %v267 = vmul.f32 %v209, 0.044715
    %v268 = vmul.f32 %v214, 0.044715
    %v269 = vmul.f32 %v217, 0.044715
    %v270 = vmul.f32 %v222, 0.044715
    %v271 = vmul.f32 %v225, 0.044715
    %v272 = vmul.f32 %v230, 0.044715
    %v273 = vmul.f32 %v233, 0.044715
    %v274 = vmul.f32 %v238, 0.044715
    %v275 = vmul.f32 %v241, 0.044715
    %v276 = vmul.f32 %v260, %v182
    %v277 = vmul.f32 %v261, %v185
    %v278 = vmul.f32 %v262, %v190
    %v279 = vmul.f32 %v263, %v193
    %v280 = vmul.f32 %v264, %v198
    %v281 = vmul.f32 %v265, %v201
    %v282 = vmul.f32 %v266, %v206
    %v283 = vmul.f32 %v267, %v209
    %v284 = vmul.f32 %v268, %v214
    %v285 = vmul.f32 %v269, %v217
    %v286 = vmul.f32 %v270, %v222
    %v287 = vmul.f32 %v271, %v225
    %v288 = vmul.f32 %v272, %v230
    %v289 = vmul.f32 %v273, %v233
    %v290 = vmul.f32 %v274, %v238
    %v291 = vmul.f32 %v275, %v241
    %v292 = vmul.f32 %v276, %v182
    %v293 = vmul.f32 %v277, %v185
    %v294 = vmul.f32 %v278, %v190
    %v295 = vmul.f32 %v279, %v193
    %v296 = vmul.f32 %v280, %v198
    %v297 = vmul.f32 %v281, %v201
    %v298 = vmul.f32 %v282, %v206
    %v299 = vmul.f32 %v283, %v209
    %v300 = vmul.f32 %v284, %v214
    %v301 = vmul.f32 %v285, %v217
    %v302 = vmul.f32 %v286, %v222
    %v303 = vmul.f32 %v287, %v225
    %v304 = vmul.f32 %v288, %v230
    %v305 = vmul.f32 %v289, %v233
    %v306 = vmul.f32 %v290, %v238
    %v307 = vmul.f32 %v291, %v241
    %v308 = vadd.f32 %v182, %v292
    %v309 = vadd.f32 %v185, %v293
    %v310 = vadd.f32 %v190, %v294
    %v311 = vadd.f32 %v193, %v295
    %v312 = vadd.f32 %v198, %v296
    %v313 = vadd.f32 %v201, %v297
    %v314 = vadd.f32 %v206, %v298
    %v315 = vadd.f32 %v209, %v299
    %v316 = vadd.f32 %v214, %v300
    %v317 = vadd.f32 %v217, %v301
    %v318 = vadd.f32 %v222, %v302
    %v319 = vadd.f32 %v225, %v303
    %v320 = vadd.f32 %v230, %v304
    %v321 = vadd.f32 %v233, %v305
    %v322 = vadd.f32 %v238, %v306
    %v323 = vadd.f32 %v241, %v307
    %v324 = vmul.f32 %v308, 0.7978846
    %v325 = vmul.f32 %v309, 0.7978846
    %v326 = vmul.f32 %v310, 0.7978846
    %v327 = vmul.f32 %v311, 0.7978846
    %v328 = vmul.f32 %v312, 0.7978846
    %v329 = vmul.f32 %v313, 0.7978846
    %v330 = vmul.f32 %v314, 0.7978846
    %v331 = vmul.f32 %v315, 0.7978846
    %v332 = vmul.f32 %v316, 0.7978846
    %v333 = vmul.f32 %v317, 0.7978846
    %v334 = vmul.f32 %v318, 0.7978846
    %v335 = vmul.f32 %v319, 0.7978846
    %v336 = vmul.f32 %v320, 0.7978846
    %v337 = vmul.f32 %v321, 0.7978846
    %v338 = vmul.f32 %v322, 0.7978846
    %v339 = vmul.f32 %v323, 0.7978846
    %v340 = vtanh.pop %v324
    %v341 = vtanh.pop %v325
    %v342 = vtanh.pop %v326
    %v343 = vtanh.pop %v327
    %v344 = vtanh.pop %v328
    %v345 = vtanh.pop %v329
    %v346 = vtanh.pop %v330
    %v347 = vtanh.pop %v331
    %v348 = vtanh.pop %v332
    %v349 = vtanh.pop %v333
    %v350 = vtanh.pop %v334
    %v351 = vtanh.pop %v335
    %v352 = vtanh.pop %v336
    %v353 = vtanh.pop %v337
    %v354 = vtanh.pop %v338
    %v355 = vtanh.pop %v339
    %v356 = vadd.f32 %v340, 1.0
    %v357 = vadd.f32 %v341, 1.0
    %v358 = vadd.f32 %v342, 1.0
    %v359 = vadd.f32 %v343, 1.0
    %v360 = vadd.f32 %v344, 1.0
    %v361 = vadd.f32 %v345, 1.0
    %v362 = vadd.f32 %v346, 1.0
    %v363 = vadd.f32 %v347, 1.0
    %v364 = vadd.f32 %v348, 1.0
    %v365 = vadd.f32 %v349, 1.0
    %v366 = vadd.f32 %v350, 1.0
    %v367 = vadd.f32 %v351, 1.0
    %v368 = vadd.f32 %v352, 1.0
    %v369 = vadd.f32 %v353, 1.0
    %v370 = vadd.f32 %v354, 1.0
    %v371 = vadd.f32 %v355, 1.0
    %v372 = vmul.f32 %v244, %v356
    %v373 = vmul.f32 %v245, %v357
    %v374 = vmul.f32 %v246, %v358
    %v375 = vmul.f32 %v247, %v359
    %v376 = vmul.f32 %v248, %v360
    %v377 = vmul.f32 %v249, %v361
    %v378 = vmul.f32 %v250, %v362
    %v379 = vmul.f32 %v251, %v363
    %v380 = vmul.f32 %v252, %v364
    %v381 = vmul.f32 %v253, %v365
    %v382 = vmul.f32 %v254, %v366
    %v383 = vmul.f32 %v255, %v367
    %v384 = vmul.f32 %v256, %v368
    %v385 = vmul.f32 %v257, %v369
    %v386 = vmul.f32 %v258, %v370
    %v387 = vmul.f32 %v259, %v371
    %v388 = vld [vmem:[%s3] sm:$0x1]
    %v390 = vlaneseq
    %v391 = vshrl.u32 %v390, 7
    %v392 = vsub.s32 0, %v391
    %v393 = vrot.slane %v388, %v392
    %v395 = vmul.f32 %v372, %v393
    %v396 = vmul.f32 %v373, %v393
    %v397 = vmul.f32 %v374, %v393
    %v398 = vmul.f32 %v375, %v393
    %v399 = vmul.f32 %v376, %v393
    %v400 = vmul.f32 %v377, %v393
    %v401 = vmul.f32 %v378, %v393
    %v402 = vmul.f32 %v379, %v393
    %v403 = vmul.f32 %v380, %v393
    %v404 = vmul.f32 %v381, %v393
    %v405 = vmul.f32 %v382, %v393
    %v406 = vmul.f32 %v383, %v393
    %v407 = vmul.f32 %v384, %v393
    %v408 = vmul.f32 %v385, %v393
    %v409 = vmul.f32 %v386, %v393
    %v410 = vmul.f32 %v387, %v393
    %v411 = vadd.f32 %v395, 0.0
    %v412 = vadd.f32 %v396, 0.0
    %v413 = vadd.f32 %v397, 0.0
    %v414 = vadd.f32 %v398, 0.0
    %v415 = vadd.f32 %v399, 0.0
    %v416 = vadd.f32 %v400, 0.0
    %v417 = vadd.f32 %v401, 0.0
    %v418 = vadd.f32 %v402, 0.0
    %v419 = vadd.f32 %v403, 0.0
    %v420 = vadd.f32 %v404, 0.0
    %v421 = vadd.f32 %v405, 0.0
    %v422 = vadd.f32 %v406, 0.0
    %v423 = vadd.f32 %v407, 0.0
    %v424 = vadd.f32 %v408, 0.0
    %v425 = vadd.f32 %v409, 0.0
    %v426 = vadd.f32 %v410, 0.0
    %v427 = vld [vmem:[#allocation2] sm:$0xff]
    %v428 = vld [vmem:[#allocation2 + $0x8] sm:$0xff]
    %v429 = vld [vmem:[#allocation2 + $0x10] sm:$0xff]
    %v430 = vld [vmem:[#allocation2 + $0x18] sm:$0xff]
    %v431 = vld [vmem:[#allocation2 + $0x20] sm:$0xff]
    %v432 = vld [vmem:[#allocation2 + $0x28] sm:$0xff]
    %v433 = vld [vmem:[#allocation2 + $0x30] sm:$0xff]
    %v434 = vld [vmem:[#allocation2 + $0x38] sm:$0xff]
    %v435 = vld [vmem:[#allocation2 + $0x40] sm:$0xff]
    %v436 = vld [vmem:[#allocation2 + $0x48] sm:$0xff]
    %v437 = vld [vmem:[#allocation2 + $0x50] sm:$0xff]
    %v438 = vld [vmem:[#allocation2 + $0x58] sm:$0xff]
    %v439 = vld [vmem:[#allocation2 + $0x60] sm:$0xff]
    %v440 = vld [vmem:[#allocation2 + $0x68] sm:$0xff]
    %v441 = vld [vmem:[#allocation2 + $0x70] sm:$0xff]
    %v442 = vld [vmem:[#allocation2 + $0x78] sm:$0xff]
    %v443 = vadd.f32 %v427, %v411
    %v444 = vadd.f32 %v428, %v412
    %v445 = vadd.f32 %v429, %v413
    %v446 = vadd.f32 %v430, %v414
    %v447 = vadd.f32 %v431, %v415
    %v448 = vadd.f32 %v432, %v416
    %v449 = vadd.f32 %v433, %v417
    %v450 = vadd.f32 %v434, %v418
    %v451 = vadd.f32 %v435, %v419
    %v452 = vadd.f32 %v436, %v420
    %v453 = vadd.f32 %v437, %v421
    %v454 = vadd.f32 %v438, %v422
    %v455 = vadd.f32 %v439, %v423
    %v456 = vadd.f32 %v440, %v424
    %v457 = vadd.f32 %v441, %v425
    %v458 = vadd.f32 %v442, %v426
    %459 = vst [vmem:[#allocation2] sm:$0xff] %v443
    %460 = vst [vmem:[#allocation2 + $0x8] sm:$0xff] %v444
    %461 = vst [vmem:[#allocation2 + $0x10] sm:$0xff] %v445
    %462 = vst [vmem:[#allocation2 + $0x18] sm:$0xff] %v446
    %463 = vst [vmem:[#allocation2 + $0x20] sm:$0xff] %v447
    %464 = vst [vmem:[#allocation2 + $0x28] sm:$0xff] %v448
    %465 = vst [vmem:[#allocation2 + $0x30] sm:$0xff] %v449
    %466 = vst [vmem:[#allocation2 + $0x38] sm:$0xff] %v450
    %467 = vst [vmem:[#allocation2 + $0x40] sm:$0xff] %v451
    %468 = vst [vmem:[#allocation2 + $0x48] sm:$0xff] %v452
    %469 = vst [vmem:[#allocation2 + $0x50] sm:$0xff] %v453
    %470 = vst [vmem:[#allocation2 + $0x58] sm:$0xff] %v454
    %471 = vst [vmem:[#allocation2 + $0x60] sm:$0xff] %v455
    %472 = vst [vmem:[#allocation2 + $0x68] sm:$0xff] %v456
    %473 = vst [vmem:[#allocation2 + $0x70] sm:$0xff] %v457
    %474 = vst [vmem:[#allocation2 + $0x78] sm:$0xff] %v458
    // Predicated region
    $region26: #{tpu_custom_call.1} parent=1 // pred_check
      %p475 = pneg %p23
    $region27: #{tpu_custom_call.1} parent=1 // pred_check_branch
      %477 = sbr.rel (%p475) target = $region29
    $region28: #{tpu_custom_call.1} parent=1 // pred_region
      %v478 = vld [vmem:[#allocation2] sm:$0xff]
      %v479 = vld [vmem:[#allocation2 + $0x8] sm:$0xff]
      %v480 = vld [vmem:[#allocation2 + $0x10] sm:$0xff]
      %v481 = vld [vmem:[#allocation2 + $0x18] sm:$0xff]
      %v482 = vld [vmem:[#allocation2 + $0x20] sm:$0xff]
      %v483 = vld [vmem:[#allocation2 + $0x28] sm:$0xff]
      %v484 = vld [vmem:[#allocation2 + $0x30] sm:$0xff]
      %v485 = vld [vmem:[#allocation2 + $0x38] sm:$0xff]
      %v486 = vld [vmem:[#allocation2 + $0x40] sm:$0xff]
      %v487 = vld [vmem:[#allocation2 + $0x48] sm:$0xff]
      %v488 = vld [vmem:[#allocation2 + $0x50] sm:$0xff]
      %v489 = vld [vmem:[#allocation2 + $0x58] sm:$0xff]
      %v490 = vld [vmem:[#allocation2 + $0x60] sm:$0xff]
      %v491 = vld [vmem:[#allocation2 + $0x68] sm:$0xff]
      %v492 = vld [vmem:[#allocation2 + $0x70] sm:$0xff]
      %v493 = vld [vmem:[#allocation2 + $0x78] sm:$0xff]
      %s494 = sld [smem:[#allocation3]]
      %v495 = vstv %s494
      %496 = vmatprep.subr.mxu0 0.0
      %497 = vmatpush1.xpose.msra.mxu0 %v493
      %498 = vmatprep.subr.mxu0 0.0
      %499 = vmatpush1.xpose.msra.mxu0 %v492
      %500 = vmatprep.subr.mxu0 0.0
      %501 = vmatpush1.xpose.msra.mxu0 %v491
      %502 = vmatprep.subr.mxu0 0.0
      %503 = vmatpush1.xpose.msra.mxu0 %v490
      %504 = vmatprep.subr.mxu0 0.0
      %505 = vmatpush1.xpose.msra.mxu0 %v489
      %506 = vmatprep.subr.mxu0 0.0
      %507 = vmatpush1.xpose.msra.mxu0 %v488
      %508 = vmatprep.subr.mxu0 0.0
      %509 = vmatpush1.xpose.msra.mxu0 %v487
      %510 = vmatprep.subr.mxu0 0.0
      %511 = vmatpush1.xpose.msra.mxu0 %v486
      %512 = vmatprep.subr.mxu0 0.0
      %513 = vmatpush1.xpose.msra.mxu0 %v485
      %514 = vmatprep.subr.mxu0 0.0
      %515 = vmatpush1.xpose.msra.mxu0 %v484
      %516 = vmatprep.subr.mxu0 0.0
      %517 = vmatpush1.xpose.msra.mxu0 %v483
      %518 = vmatprep.subr.mxu0 0.0
      %519 = vmatpush1.xpose.msra.mxu0 %v482
      %520 = vmatprep.subr.mxu0 0.0
      %521 = vmatpush1.xpose.msra.mxu0 %v481
      %522 = vmatprep.subr.mxu0 0.0
      %523 = vmatpush1.xpose.msra.mxu0 %v480
      %524 = vmatprep.subr.mxu0 0.0
      %525 = vmatpush1.xpose.msra.mxu0 %v479
      %526 = vmatprep.subr.mxu0 0.0
      %527 = vmatpush1.xpose.msra.mxu0 %v478
      %528 = vmatprep.subr.mxu0 0.0
      %529 = vmatpush2.xpose.msra.mxu0 0.0
      %530 = vmatprep.subr.mxu0 0.0
      %531 = vmatpush2.xpose.msra.mxu0 0.0
      %532 = vmatprep.subr.mxu0 0.0
      %533 = vmatpush2.xpose.msra.mxu0 0.0
      %534 = vmatprep.subr.mxu0 0.0
      %535 = vmatpush2.xpose.msra.mxu0 0.0
      %536 = vmatprep.subr.mxu0 0.0
      %537 = vmatpush2.xpose.msra.mxu0 0.0
      %538 = vmatprep.subr.mxu0 0.0
      %539 = vmatpush2.xpose.msra.mxu0 0.0
      %540 = vmatprep.subr.mxu0 0.0
      %541 = vmatpush2.xpose.msra.mxu0 0.0
      %542 = vmatprep.subr.mxu0 0.0
      %543 = vmatpush2.xpose.msra.mxu0 0.0
      %544 = vmatprep.subr.mxu0 0.0
      %545 = vmatpush2.xpose.msra.mxu0 0.0
      %546 = vmatprep.subr.mxu0 0.0
      %547 = vmatpush2.xpose.msra.mxu0 0.0
      %548 = vmatprep.subr.mxu0 0.0
      %549 = vmatpush2.xpose.msra.mxu0 0.0
      %550 = vmatprep.subr.mxu0 0.0
      %551 = vmatpush2.xpose.msra.mxu0 0.0
      %552 = vmatprep.subr.mxu0 0.0
      %553 = vmatpush2.xpose.msra.mxu0 0.0
      %554 = vmatprep.subr.mxu0 0.0
      %555 = vmatpush2.xpose.msra.mxu0 0.0
      %556 = vmatprep.subr.mxu0 0.0
      %557 = vmatpush2.xpose.msra.mxu0 0.0
      %558 = vmatprep.subr.mxu0 0.0
      %559 = vmatpush2.xpose.msra.mxu0 0.0
      %560 = vmatprep.mubr.f32.mxu0 0.0
      %561 = vmatmul.mubr.f32.gmra.mxu0 1.0
      %v562 = vpop.f32.mrf.mxu0
      %v563 = vadd.f32 %v495, %v562
      %v564 = vpop.f32.mrf.mxu0
      %565 = vdwg.mxu0
      %566 = vst [vmem:[#allocation4] sm:$0x1] %v563
    $region29: #{tpu_custom_call.1} parent=1 // pred_fallthru
      _
    // Predicated region
    $region30: #{tpu_custom_call.1} parent=1 // pred_check
      _
    $region31: #{tpu_custom_call.1} parent=1 // pred_check_branch
      %568 = sbr.rel (0) target = $region33
    $region32: #{tpu_custom_call.1} parent=1 // pred_region
      %s570 = ssub.s32 16, 16
      %571 = vsyncadd [#allocation5], %s570
      %s573 = sshll.u32 [#allocation4], 4
      %s574 = int_to_ptr.vmem [resolvable:$true] %s573
      %576 = dma.vmem_to_hbm [thread:$0]  %s574, 16, %s5, [#allocation5]
    $region33: #{tpu_custom_call.1} parent=1 // pred_fallthru
      _
    // Predicated region
    $region34: #{tpu_custom_call.1} parent=1 // pred_check
      _
    $region35: #{tpu_custom_call.1} parent=1 // pred_check_branch
      %578 = sbr.rel (0) target = $region37
    $region36: #{tpu_custom_call.1} parent=1 // pred_region
      %579 = dma.done [#allocation5], 16
    $region37: #{tpu_custom_call.1} parent=1 // pred_fallthru
      _
    %580 = vsyncpa [#allocation5], 1

</llo_original>
